<compile_context>
chip_gen: v7x
topology: tpu7x:2x2x1
jax: 0.10.0
libtpu: 0.0.40
codegen_flags: <defaults>
</compile_context>

<pallas_src>
import jax
import jax.numpy as jnp
from jax.experimental import pallas as pl
from jax.experimental.pallas import tpu as pltpu

FEATURE_DIM = 1664  # DenseNet169 final feature channel count
LANE = 128
SUBLANE = 8


def _round_up(x, m):
    return ((x + m - 1) // m) * m


def head_kernel(x_ref, w_ref, b_ref, o_ref):
    """Fused ReLU + global-average-pool + Linear + Sigmoid for one batch tile.

    x_ref: (TB, S, C)  backbone features, channels lane-dense (C = 13*128)
    w_ref: (C, Kp)     f32  Linear weight^T, pre-scaled by 1/S, zero-padded
    b_ref: (1, Kp)     f32  Linear bias, zero-padded
    o_ref: (TB, Kp)    f32  sigmoid(mean_spatial(relu(x)) @ W^T + b)
    """
    x = jnp.maximum(x_ref[...], 0.0)                    # ReLU (native dtype)
    # Spatial (sublane-axis) reduction with f32 accumulation; 1/S is already
    # folded into w_ref, so the pooled *sum* is the right matmul input.
    pooled = jnp.sum(x, axis=1, dtype=jnp.float32)      # (TB, C)
    logits = jnp.dot(pooled, w_ref[...],
                     preferred_element_type=jnp.float32) + b_ref[...]
    o_ref[...] = 1.0 / (1.0 + jnp.exp(-logits))         # sigmoid


def _vmem_capacity_bytes():
    """Per-core physical VMEM (generation-aware); conservative fallback."""
    try:
        info = pltpu.get_tpu_info()
        for attr in ("vmem_capacity_bytes", "vmem_bytes", "vmem_size_bytes"):
            cap = getattr(info, attr, None)
            if cap:
                return int(cap)
    except Exception:
        pass
    return 64 << 20  # v7x per-core VMEM (smallest current generation)


def _resident_spec(block_shape, index_map):
    """BlockSpec for grid-invariant operands: a single VMEM buffer suffices."""
    try:
        return pl.BlockSpec(block_shape, index_map, pipeline_mode=pl.Buffered(1))
    except Exception:
        return pl.BlockSpec(block_shape, index_map)


def _choose_batch_tile(B, padded_bytes_per_image, per_buffer_budget):
    """Largest batch tile whose padded footprint fits one pipeline buffer."""
    cap = max(1, int(per_buffer_budget // max(1, padded_bytes_per_image)))
    # Keep >= 2 grid steps when the batch is big enough: the "parallel" batch
    # axis then shards across v7x's two TensorCores (no-op on v5e/v6e).
    if B >= 2 * SUBLANE:
        cap = min(cap, _round_up(-(-B // 2), SUBLANE))
    if cap >= B:
        return B
    if B <= SUBLANE:
        # Output block's second-to-last dim must be 8-aligned or the full dim.
        return B
    tb = max(SUBLANE, (cap // SUBLANE) * SUBLANE)
    # Prefer a tile that divides B: no garbage-row tail DMA / compute.
    for cand in range(tb, SUBLANE - 1, -SUBLANE):
        if B % cand == 0:
            return cand
    return tb


def densenet169_change_avg_head(feats, weight, bias, *, data_format="NCHW"):
    """Head of DenseNet169_change_avg.

    feats:  (B, 1664, H, W) if data_format == "NCHW" (PyTorch layout), or
            (B, H, W, 1664) if data_format == "NHWC" (native TPU conv layout).
    weight: (classCount, 1664) f32  (PyTorch nn.Linear layout)
    bias:   (classCount,)      f32
    Returns (B, classCount) f32 sigmoid probabilities.
    """
    if data_format == "NCHW":
        B, C, H, W = feats.shape
        # TODO(synk): a TPU-native backbone emits NHWC directly; this transpose
        # is layout plumbing outside the kernel for PyTorch-layout inputs only.
        x = jnp.transpose(feats, (0, 2, 3, 1))
    elif data_format == "NHWC":
        B, H, W, C = feats.shape
        x = feats
    else:
        raise ValueError(f"unknown data_format {data_format!r}")
    assert C == FEATURE_DIM, f"expected {FEATURE_DIM} channels, got {C}"
    S = H * W
    x = x.reshape(B, S, C)                       # channels lane-dense

    K = weight.shape[0]
    Kp = _round_up(K, LANE)                      # lane-dense output width
    # Fold 1/S into the weight: pooled_sum @ (W^T / S) == pooled_mean @ W^T.
    w_t = jnp.pad(jnp.transpose(weight).astype(jnp.float32) * (1.0 / float(S)),
                  ((0, 0), (0, Kp - K)))         # (C, Kp)
    b_p = jnp.pad(bias.astype(jnp.float32), (0, Kp - K)).reshape(1, Kp)

    # --- VMEM-aware batch tiling, padded accounting -----------------------
    itemsize = jnp.dtype(x.dtype).itemsize
    sub_mult = SUBLANE * max(1, 4 // itemsize)       # bf16 packs 16 rows/vreg
    padded_bytes_per_image = (_round_up(S, sub_mult) * _round_up(C, LANE)
                              * itemsize)

    vmem_cap = _vmem_capacity_bytes()                # physical per-core VMEM
    vmem_limit = int(min(vmem_cap * 3 // 4, 96 << 20))   # 48 MiB v7x, 96 MiB v5e/v6e
    weight_bytes = C * Kp * 4
    fixed_bytes = 2 * weight_bytes + (4 << 20)       # weight + bias/out + slack
    per_buffer_budget = max(1 << 20, (vmem_limit - fixed_bytes) // 2)
    tb = _choose_batch_tile(B, padded_bytes_per_image, per_buffer_budget)
    grid = (pl.cdiv(B, tb),)

    cost = pl.CostEstimate(
        flops=2 * B * C * Kp + 2 * B * C * S,        # matmul + relu/sum
        transcendentals=B * Kp,                      # sigmoid exp
        bytes_accessed=(B * S * C * itemsize + C * Kp * 4 + Kp * 4 + B * Kp * 4),
    )

    out_padded = pl.pallas_call(
        head_kernel,
        out_shape=jax.ShapeDtypeStruct((B, Kp), jnp.float32),
        grid=grid,
        in_specs=[
            pl.BlockSpec((tb, S, C), lambda b: (b, 0, 0)),   # streamed features
            _resident_spec((C, Kp), lambda b: (0, 0)),       # resident weight
            _resident_spec((1, Kp), lambda b: (0, 0)),       # resident bias
        ],
        out_specs=pl.BlockSpec((tb, Kp), lambda b: (b, 0)),
        compiler_params=pltpu.CompilerParams(
            dimension_semantics=("parallel",),
            vmem_limit_bytes=vmem_limit),
        cost_estimate=cost,
    )(x, w_t, b_p)

    return out_padded[:, :K]


if __name__ == "__main__":
    key = jax.random.PRNGKey(0)
    k_feat, k_w, k_b = jax.random.split(key, 3)

    # Small shapes: batch=2, DenseNet169 feature map 1664 x 4 x 4, classCount=14.
    B, H, W = 2, 4, 4
    classCount = 14

    feats = jax.random.normal(k_feat, (B, FEATURE_DIM, H, W), dtype=jnp.float32)

    # Deterministic nn.Linear(1664, classCount)-style init: U(-1/sqrt(fan_in), +)
    bound = 1.0 / (FEATURE_DIM ** 0.5)
    weight = jax.random.uniform(k_w, (classCount, FEATURE_DIM),
                                dtype=jnp.float32, minval=-bound, maxval=bound)
    bias = jax.random.uniform(k_b, (classCount,),
                              dtype=jnp.float32, minval=-bound, maxval=bound)

    out = densenet169_change_avg_head(feats, weight, bias, data_format="NCHW")
    out = jax.block_until_ready(out)

    # Pure-JAX reference of the same head for a correctness check.
    ref = jax.nn.sigmoid(
        jnp.mean(jax.nn.relu(feats), axis=(2, 3)) @ weight.T + bias)
    assert out.shape == (B, classCount)
    assert jnp.allclose(out, ref, atol=1e-5, rtol=1e-5), "mismatch vs reference"

    print("KERNEL_OK")
</pallas_src>

<mosaic_0001>
module attributes {stable_mosaic.version = 11 : i64} {
  func.func @head_kernel(%arg0: i32, %arg1: memref<2x16x1664xf32, #tpu.memory_space<vmem>>, %arg2: memref<1664x128xf32, #tpu.memory_space<vmem>>, %arg3: memref<1x128xf32, #tpu.memory_space<vmem>>, %arg4: memref<2x128xf32, #tpu.memory_space<vmem>>) attributes {dimension_semantics = [#tpu.dimension_semantics<parallel>], iteration_bounds = array<i64: 1>, scalar_prefetch = 0 : i64, scratch_operands = 0 : i64, tpu.core_type = #tpu.core_type<tc>, window_params = [{transform_indices = @transform_0, window_bounds = array<i64: 2, 16, 1664>}, {pipeline_mode = #tpu.pipeline_mode<synchronous>, transform_indices = @transform_1, window_bounds = array<i64: 1664, 128>}, {pipeline_mode = #tpu.pipeline_mode<synchronous>, transform_indices = @transform_2, window_bounds = array<i64: 1, 128>}, {transform_indices = @transform_3, window_bounds = array<i64: 2, 128>}]} {
    %c0 = arith.constant 0 : index
    %c0_0 = arith.constant 0 : index
    %c0_1 = arith.constant 0 : index
    %0 = vector.load %arg1[%c0, %c0_0, %c0_1] : memref<2x16x1664xf32, #tpu.memory_space<vmem>>, vector<2x16x1664xf32>
    %cst = arith.constant 0.000000e+00 : f32
    %1 = vector.broadcast %cst : f32 to vector<2x16x1664xf32>
    %2 = arith.maximumf %0, %1 : vector<2x16x1664xf32>
    %cst_2 = arith.constant dense<0.000000e+00> : vector<2x1664xf32>
    %3 = vector.multi_reduction <add>, %2, %cst_2 [1] : vector<2x16x1664xf32> to vector<2x1664xf32>
    %c0_3 = arith.constant 0 : index
    %c0_4 = arith.constant 0 : index
    %4 = vector.load %arg2[%c0_3, %c0_4] : memref<1664x128xf32, #tpu.memory_space<vmem>>, vector<1664x128xf32>
    %cst_5 = arith.constant dense<0.000000e+00> : vector<2x128xf32>
    %5 = tpu.matmul %3, %4, %cst_5 {dimension_numbers = #tpu.dot_dimension_numbers<[1], [0], [0], [1], [0, 0, 1, 1], [], []>} : vector<2x1664xf32>, vector<1664x128xf32>, vector<2x128xf32> -> vector<2x128xf32>
    %c0_6 = arith.constant 0 : index
    %c0_7 = arith.constant 0 : index
    %6 = vector.load %arg3[%c0_6, %c0_7] : memref<1x128xf32, #tpu.memory_space<vmem>>, vector<1x128xf32>
    %7 = vector.broadcast %6 : vector<1x128xf32> to vector<2x128xf32>
    %8 = arith.addf %5, %7 : vector<2x128xf32>
    %cst_8 = arith.constant 0.000000e+00 : f32
    %9 = vector.broadcast %cst_8 : f32 to vector<2x128xf32>
    %10 = arith.subf %9, %8 : vector<2x128xf32>
    %11 = math.exp %10 : vector<2x128xf32>
    %cst_9 = arith.constant 1.000000e+00 : f32
    %12 = vector.broadcast %cst_9 : f32 to vector<2x128xf32>
    %13 = arith.addf %12, %11 : vector<2x128xf32>
    %cst_10 = arith.constant 1.000000e+00 : f32
    %14 = vector.broadcast %cst_10 : f32 to vector<2x128xf32>
    %15 = arith.divf %14, %13 : vector<2x128xf32>
    %c0_11 = arith.constant 0 : index
    %c0_12 = arith.constant 0 : index
    %16 = vector.load %arg4[%c0_11, %c0_12] : memref<2x128xf32, #tpu.memory_space<vmem>>, vector<2x128xf32>
    tpu.vector_store %arg4[%c0_11, %c0_12], %15 {strides = array<i32>} : memref<2x128xf32, #tpu.memory_space<vmem>>, vector<2x128xf32>,
    return
  }
  func.func @transform_0(%arg0: i32) -> (i32, i32, i32) {
    %c0_i32 = arith.constant 0 : i32
    %c0_i32_0 = arith.constant 0 : i32
    %c0_i32_1 = arith.constant 0 : i32
    return %arg0, %c0_i32, %c0_i32_0 : i32, i32, i32
  }
  func.func @transform_1(%arg0: i32) -> (i32, i32) {
    %c0_i32 = arith.constant 0 : i32
    %c0_i32_0 = arith.constant 0 : i32
    %c0_i32_1 = arith.constant 0 : i32
    return %c0_i32, %c0_i32_0 : i32, i32
  }
  func.func @transform_2(%arg0: i32) -> (i32, i32) {
    %c0_i32 = arith.constant 0 : i32
    %c0_i32_0 = arith.constant 0 : i32
    %c0_i32_1 = arith.constant 0 : i32
    return %c0_i32, %c0_i32_0 : i32, i32
  }
  func.func @transform_3(%arg0: i32) -> (i32, i32) {
    %c0_i32 = arith.constant 0 : i32
    %c0_i32_0 = arith.constant 0 : i32
    return %arg0, %c0_i32 : i32, i32
  }
}

</mosaic_0001>

<llo_original>
// kernel: tpu_custom_call.1
$region0: #{tpu_custom_call.1}
  #allocation0 [shape = 'u32[]', space=smem, size = 0x4, offset = 0x4, fixed_abs, tag = 'smem constant byte address 0x4 - core index']
  #allocation1 [shape = 'u32[144,128]{1,0:T(1,128)}', space=vmem, size = 0x12000, scoped, tag = 'internal scratch']
  %s0 = inlined_call_operand.hbm [shape: f32[2,16,1664], index: 0, kind: input, shape index: {}]
  %s1 = inlined_call_operand.hbm [shape: f32[1664,128], index: 1, kind: input, shape index: {}]
  %s2 = inlined_call_operand.vmem [shape: f32[1,128], index: 2, kind: input, shape index: {}]
  %s3 = inlined_call_operand.hbm [shape: f32[2,128], index: 3, kind: output, shape index: {}]
  %s4 = sld [smem:[#allocation0]]
  $region30: #{tpu_custom_call.1} parent=0
    _
  %s6 = ssub.s32 1, %s4
  %s7 = scalar_select 0, %s6, %s4
  $region1: #{tpu_custom_call.1} parent=0
    #allocation2 [shape = 'u8[212992]{0}', space=vmem, size = 0x34000, scoped, tag = 'input window, operand 0, single buffered']
    #allocation3 [shape = 's32[1]{0}', space=sflag, size = 0x4, scoped, tag = 'scoped memory for tpu_custom_call.1']
    #allocation4 [shape = 's32[1]{0}', space=sflag, size = 0x4, scoped, tag = 'scoped memory for tpu_custom_call.1']
    #allocation5 [shape = 'u8[851968]{0}', space=vmem, size = 0xd0000, scoped, tag = 'input window, operand 1, single buffered']
    #allocation6 [shape = 's32[1]{0}', space=sflag, size = 0x4, scoped, tag = 'scoped memory for tpu_custom_call.1']
    #allocation7 [shape = 'u8[1024]{0}', space=vmem, size = 0x400, scoped, tag = 'output window, operand 0, single buffered']
    %8 = vsyncpa [#allocation3], 0
    %9 = vsyncpa [#allocation6], 0
    %10 = vsyncpa [#allocation4], 0
    // Predicated region
    $region2: #{tpu_custom_call.1} parent=1 // pred_check
      _
    $region3: #{tpu_custom_call.1} parent=1 // pred_check_branch
      %12 = sbr.rel (0) target = $region5
    $region4: #{tpu_custom_call.1} parent=1 // pred_region
      %s14 = ssub.s32 6656, 6656
      %15 = vsyncadd [#allocation3], %s14
      %s16 = sshll.u32 [#allocation2], 4
      %s17 = int_to_ptr.vmem [resolvable:$true] %s16
      %22 = dma.hbm_to_vmem [thread:$0]  %s0, 6656, %s17, [#allocation3], 1664, 1664, 104
    $region5: #{tpu_custom_call.1} parent=1 // pred_fallthru
      _
    // Predicated region
    $region6: #{tpu_custom_call.1} parent=1 // pred_check
      _
    $region7: #{tpu_custom_call.1} parent=1 // pred_check_branch
      %24 = sbr.rel (0) target = $region9
    $region8: #{tpu_custom_call.1} parent=1 // pred_region
      %s26 = ssub.s32 26624, 26624
      %27 = vsyncadd [#allocation6], %s26
      %s28 = sshll.u32 [#allocation5], 4
      %s29 = int_to_ptr.vmem [resolvable:$true] %s28
      %34 = dma.hbm_to_vmem [thread:$0]  %s1, 26624, %s29, [#allocation6], 128, 128, 8
    $region9: #{tpu_custom_call.1} parent=1 // pred_fallthru
      _
    // Predicated region
    $region10: #{tpu_custom_call.1} parent=1 // pred_check
      _
    $region11: #{tpu_custom_call.1} parent=1 // pred_check_branch
      %36 = sbr.rel (0) target = $region13
    $region12: #{tpu_custom_call.1} parent=1 // pred_region
      _
    $region13: #{tpu_custom_call.1} parent=1 // pred_fallthru
      _
    // Predicated region
    $region14: #{tpu_custom_call.1} parent=1 // pred_check
      _
    $region15: #{tpu_custom_call.1} parent=1 // pred_check_branch
      %38 = sbr.rel (0) target = $region17
    $region16: #{tpu_custom_call.1} parent=1 // pred_region
      %39 = dma.done [#allocation3], 6656
    $region17: #{tpu_custom_call.1} parent=1 // pred_fallthru
      _
    // Predicated region
    $region18: #{tpu_custom_call.1} parent=1 // pred_check
      _
    $region19: #{tpu_custom_call.1} parent=1 // pred_check_branch
      %41 = sbr.rel (0) target = $region21
    $region20: #{tpu_custom_call.1} parent=1 // pred_region
      %42 = dma.done [#allocation6], 26624
    $region21: #{tpu_custom_call.1} parent=1 // pred_fallthru
      _
    %v43 = vld [vmem:[#allocation2] sm:$0xff]
    %v44 = vld [vmem:[#allocation2 + $0x8] sm:$0xff]
    %v45 = vld [vmem:[#allocation2 + $0x10] sm:$0xff]
    %v46 = vld [vmem:[#allocation2 + $0x18] sm:$0xff]
    %v47 = vld [vmem:[#allocation2 + $0x20] sm:$0xff]
    %v48 = vld [vmem:[#allocation2 + $0x28] sm:$0xff]
    %v49 = vld [vmem:[#allocation2 + $0x30] sm:$0xff]
    %v50 = vld [vmem:[#allocation2 + $0x38] sm:$0xff]
    %v51 = vld [vmem:[#allocation2 + $0x40] sm:$0xff]
    %v52 = vld [vmem:[#allocation2 + $0x48] sm:$0xff]
    %v53 = vld [vmem:[#allocation2 + $0x50] sm:$0xff]
    %v54 = vld [vmem:[#allocation2 + $0x58] sm:$0xff]
    %v55 = vld [vmem:[#allocation2 + $0x60] sm:$0xff]
    %v56 = vld [vmem:[#allocation2 + $0x68] sm:$0xff]
    %v57 = vld [vmem:[#allocation2 + $0x70] sm:$0xff]
    %v58 = vld [vmem:[#allocation2 + $0x78] sm:$0xff]
    %v59 = vld [vmem:[#allocation2 + $0x80] sm:$0xff]
    %v60 = vld [vmem:[#allocation2 + $0x88] sm:$0xff]
    %v61 = vld [vmem:[#allocation2 + $0x90] sm:$0xff]
    %v62 = vld [vmem:[#allocation2 + $0x98] sm:$0xff]
    %v63 = vld [vmem:[#allocation2 + $0xa0] sm:$0xff]
    %v64 = vld [vmem:[#allocation2 + $0xa8] sm:$0xff]
    %v65 = vld [vmem:[#allocation2 + $0xb0] sm:$0xff]
    %v66 = vld [vmem:[#allocation2 + $0xb8] sm:$0xff]
    %v67 = vld [vmem:[#allocation2 + $0xc0] sm:$0xff]
    %v68 = vld [vmem:[#allocation2 + $0xc8] sm:$0xff]
    %v69 = vld [vmem:[#allocation2 + $0xd0] sm:$0xff]
    %v70 = vld [vmem:[#allocation2 + $0xd8] sm:$0xff]
    %v71 = vld [vmem:[#allocation2 + $0xe0] sm:$0xff]
    %v72 = vld [vmem:[#allocation2 + $0xe8] sm:$0xff]
    %v73 = vld [vmem:[#allocation2 + $0xf0] sm:$0xff]
    %v74 = vld [vmem:[#allocation2 + $0xf8] sm:$0xff]
    %v75 = vld [vmem:[#allocation2 + $0x100] sm:$0xff]
    %v76 = vld [vmem:[#allocation2 + $0x108] sm:$0xff]
    %v77 = vld [vmem:[#allocation2 + $0x110] sm:$0xff]
    %v78 = vld [vmem:[#allocation2 + $0x118] sm:$0xff]
    %v79 = vld [vmem:[#allocation2 + $0x120] sm:$0xff]
    %v80 = vld [vmem:[#allocation2 + $0x128] sm:$0xff]
    %v81 = vld [vmem:[#allocation2 + $0x130] sm:$0xff]
    %v82 = vld [vmem:[#allocation2 + $0x138] sm:$0xff]
    %v83 = vld [vmem:[#allocation2 + $0x140] sm:$0xff]
    %v84 = vld [vmem:[#allocation2 + $0x148] sm:$0xff]
    %v85 = vld [vmem:[#allocation2 + $0x150] sm:$0xff]
    %v86 = vld [vmem:[#allocation2 + $0x158] sm:$0xff]
    %v87 = vld [vmem:[#allocation2 + $0x160] sm:$0xff]
    %v88 = vld [vmem:[#allocation2 + $0x168] sm:$0xff]
    %v89 = vld [vmem:[#allocation2 + $0x170] sm:$0xff]
    %v90 = vld [vmem:[#allocation2 + $0x178] sm:$0xff]
    %v91 = vld [vmem:[#allocation2 + $0x180] sm:$0xff]
    %v92 = vld [vmem:[#allocation2 + $0x188] sm:$0xff]
    %v93 = vld [vmem:[#allocation2 + $0x190] sm:$0xff]
    %v94 = vld [vmem:[#allocation2 + $0x198] sm:$0xff]
    %v95 = vmax.f32 %v43, 0.0
    %v96 = vmax.f32 %v44, 0.0
    %v97 = vmax.f32 %v45, 0.0
    %v98 = vmax.f32 %v46, 0.0
    %v99 = vmax.f32 %v47, 0.0
    %v100 = vmax.f32 %v48, 0.0
    %v101 = vmax.f32 %v49, 0.0
    %v102 = vmax.f32 %v50, 0.0
    %v103 = vmax.f32 %v51, 0.0
    %v104 = vmax.f32 %v52, 0.0
    %v105 = vmax.f32 %v53, 0.0
    %v106 = vmax.f32 %v54, 0.0
    %v107 = vmax.f32 %v55, 0.0
    %v108 = vmax.f32 %v56, 0.0
    %v109 = vmax.f32 %v57, 0.0
    %v110 = vmax.f32 %v58, 0.0
    %v111 = vmax.f32 %v59, 0.0
    %v112 = vmax.f32 %v60, 0.0
    %v113 = vmax.f32 %v61, 0.0
    %v114 = vmax.f32 %v62, 0.0
    %v115 = vmax.f32 %v63, 0.0
    %v116 = vmax.f32 %v64, 0.0
    %v117 = vmax.f32 %v65, 0.0
    %v118 = vmax.f32 %v66, 0.0
    %v119 = vmax.f32 %v67, 0.0
    %v120 = vmax.f32 %v68, 0.0
    %v121 = vmax.f32 %v69, 0.0
    %v122 = vmax.f32 %v70, 0.0
    %v123 = vmax.f32 %v71, 0.0
    %v124 = vmax.f32 %v72, 0.0
    %v125 = vmax.f32 %v73, 0.0
    %v126 = vmax.f32 %v74, 0.0
    %v127 = vmax.f32 %v75, 0.0
    %v128 = vmax.f32 %v76, 0.0
    %v129 = vmax.f32 %v77, 0.0
    %v130 = vmax.f32 %v78, 0.0
    %v131 = vmax.f32 %v79, 0.0
    %v132 = vmax.f32 %v80, 0.0
    %v133 = vmax.f32 %v81, 0.0
    %v134 = vmax.f32 %v82, 0.0
    %v135 = vmax.f32 %v83, 0.0
    %v136 = vmax.f32 %v84, 0.0
    %v137 = vmax.f32 %v85, 0.0
    %v138 = vmax.f32 %v86, 0.0
    %v139 = vmax.f32 %v87, 0.0
    %v140 = vmax.f32 %v88, 0.0
    %v141 = vmax.f32 %v89, 0.0
    %v142 = vmax.f32 %v90, 0.0
    %v143 = vmax.f32 %v91, 0.0
    %v144 = vmax.f32 %v92, 0.0
    %v145 = vmax.f32 %v93, 0.0
    %v146 = vmax.f32 %v94, 0.0
    %v147 = vadd.f32 %v95, %v108
    %v148 = vrot.slane %v147, 4
    %v149 = vadd.f32 %v147, %v148
    %v150 = vrot.slane %v149, 2
    %v151 = vadd.f32 %v149, %v150
    %v152 = vrot.slane %v151, 1
    %v153 = vadd.f32 %v151, %v152
    %v154 = vadd.f32 %v96, %v109
    %v155 = vrot.slane %v154, 4
    %v156 = vadd.f32 %v154, %v155
    %v157 = vrot.slane %v156, 2
    %v158 = vadd.f32 %v156, %v157
    %v159 = vrot.slane %v158, 1
    %v160 = vadd.f32 %v158, %v159
    %v161 = vadd.f32 %v97, %v110
    %v162 = vrot.slane %v161, 4
    %v163 = vadd.f32 %v161, %v162
    %v164 = vrot.slane %v163, 2
    %v165 = vadd.f32 %v163, %v164
    %v166 = vrot.slane %v165, 1
    %v167 = vadd.f32 %v165, %v166
    %v168 = vadd.f32 %v98, %v111
    %v169 = vrot.slane %v168, 4
    %v170 = vadd.f32 %v168, %v169
    %v171 = vrot.slane %v170, 2
    %v172 = vadd.f32 %v170, %v171
    %v173 = vrot.slane %v172, 1
    %v174 = vadd.f32 %v172, %v173
    %v175 = vadd.f32 %v99, %v112
    %v176 = vrot.slane %v175, 4
    %v177 = vadd.f32 %v175, %v176
    %v178 = vrot.slane %v177, 2
    %v179 = vadd.f32 %v177, %v178
    %v180 = vrot.slane %v179, 1
    %v181 = vadd.f32 %v179, %v180
    %v182 = vadd.f32 %v100, %v113
    %v183 = vrot.slane %v182, 4
    %v184 = vadd.f32 %v182, %v183
    %v185 = vrot.slane %v184, 2
    %v186 = vadd.f32 %v184, %v185
    %v187 = vrot.slane %v186, 1
    %v188 = vadd.f32 %v186, %v187
    %v189 = vadd.f32 %v101, %v114
    %v190 = vrot.slane %v189, 4
    %v191 = vadd.f32 %v189, %v190
    %v192 = vrot.slane %v191, 2
    %v193 = vadd.f32 %v191, %v192
    %v194 = vrot.slane %v193, 1
    %v195 = vadd.f32 %v193, %v194
    %v196 = vadd.f32 %v102, %v115
    %v197 = vrot.slane %v196, 4
    %v198 = vadd.f32 %v196, %v197
    %v199 = vrot.slane %v198, 2
    %v200 = vadd.f32 %v198, %v199
    %v201 = vrot.slane %v200, 1
    %v202 = vadd.f32 %v200, %v201
    %v203 = vadd.f32 %v103, %v116
    %v204 = vrot.slane %v203, 4
    %v205 = vadd.f32 %v203, %v204
    %v206 = vrot.slane %v205, 2
    %v207 = vadd.f32 %v205, %v206
    %v208 = vrot.slane %v207, 1
    %v209 = vadd.f32 %v207, %v208
    %v210 = vadd.f32 %v104, %v117
    %v211 = vrot.slane %v210, 4
    %v212 = vadd.f32 %v210, %v211
    %v213 = vrot.slane %v212, 2
    %v214 = vadd.f32 %v212, %v213
    %v215 = vrot.slane %v214, 1
    %v216 = vadd.f32 %v214, %v215
    %v217 = vadd.f32 %v105, %v118
    %v218 = vrot.slane %v217, 4
    %v219 = vadd.f32 %v217, %v218
    %v220 = vrot.slane %v219, 2
    %v221 = vadd.f32 %v219, %v220
    %v222 = vrot.slane %v221, 1
    %v223 = vadd.f32 %v221, %v222
    %v224 = vadd.f32 %v106, %v119
    %v225 = vrot.slane %v224, 4
    %v226 = vadd.f32 %v224, %v225
    %v227 = vrot.slane %v226, 2
    %v228 = vadd.f32 %v226, %v227
    %v229 = vrot.slane %v228, 1
    %v230 = vadd.f32 %v228, %v229
    %v231 = vadd.f32 %v107, %v120
    %v232 = vrot.slane %v231, 4
    %v233 = vadd.f32 %v231, %v232
    %v234 = vrot.slane %v233, 2
    %v235 = vadd.f32 %v233, %v234
    %v236 = vrot.slane %v235, 1
    %v237 = vadd.f32 %v235, %v236
    %v238 = vadd.f32 %v121, %v134
    %v239 = vrot.slane %v238, 4
    %v240 = vadd.f32 %v238, %v239
    %v241 = vrot.slane %v240, 2
    %v242 = vadd.f32 %v240, %v241
    %v243 = vrot.slane %v242, 1
    %v244 = vadd.f32 %v242, %v243
    %v245 = vadd.f32 %v122, %v135
    %v246 = vrot.slane %v245, 4
    %v247 = vadd.f32 %v245, %v246
    %v248 = vrot.slane %v247, 2
    %v249 = vadd.f32 %v247, %v248
    %v250 = vrot.slane %v249, 1
    %v251 = vadd.f32 %v249, %v250
    %v252 = vadd.f32 %v123, %v136
    %v253 = vrot.slane %v252, 4
    %v254 = vadd.f32 %v252, %v253
    %v255 = vrot.slane %v254, 2
    %v256 = vadd.f32 %v254, %v255
    %v257 = vrot.slane %v256, 1
    %v258 = vadd.f32 %v256, %v257
    %v259 = vadd.f32 %v124, %v137
    %v260 = vrot.slane %v259, 4
    %v261 = vadd.f32 %v259, %v260
    %v262 = vrot.slane %v261, 2
    %v263 = vadd.f32 %v261, %v262
    %v264 = vrot.slane %v263, 1
    %v265 = vadd.f32 %v263, %v264
    %v266 = vadd.f32 %v125, %v138
    %v267 = vrot.slane %v266, 4
    %v268 = vadd.f32 %v266, %v267
    %v269 = vrot.slane %v268, 2
    %v270 = vadd.f32 %v268, %v269
    %v271 = vrot.slane %v270, 1
    %v272 = vadd.f32 %v270, %v271
    %v273 = vadd.f32 %v126, %v139
    %v274 = vrot.slane %v273, 4
    %v275 = vadd.f32 %v273, %v274
    %v276 = vrot.slane %v275, 2
    %v277 = vadd.f32 %v275, %v276
    %v278 = vrot.slane %v277, 1
    %v279 = vadd.f32 %v277, %v278
    %v280 = vadd.f32 %v127, %v140
    %v281 = vrot.slane %v280, 4
    %v282 = vadd.f32 %v280, %v281
    %v283 = vrot.slane %v282, 2
    %v284 = vadd.f32 %v282, %v283
    %v285 = vrot.slane %v284, 1
    %v286 = vadd.f32 %v284, %v285
    %v287 = vadd.f32 %v128, %v141
    %v288 = vrot.slane %v287, 4
    %v289 = vadd.f32 %v287, %v288
    %v290 = vrot.slane %v289, 2
    %v291 = vadd.f32 %v289, %v290
    %v292 = vrot.slane %v291, 1
    %v293 = vadd.f32 %v291, %v292
    %v294 = vadd.f32 %v129, %v142
    %v295 = vrot.slane %v294, 4
    %v296 = vadd.f32 %v294, %v295
    %v297 = vrot.slane %v296, 2
    %v298 = vadd.f32 %v296, %v297
    %v299 = vrot.slane %v298, 1
    %v300 = vadd.f32 %v298, %v299
    %v301 = vadd.f32 %v130, %v143
    %v302 = vrot.slane %v301, 4
    %v303 = vadd.f32 %v301, %v302
    %v304 = vrot.slane %v303, 2
    %v305 = vadd.f32 %v303, %v304
    %v306 = vrot.slane %v305, 1
    %v307 = vadd.f32 %v305, %v306
    %v308 = vadd.f32 %v131, %v144
    %v309 = vrot.slane %v308, 4
    %v310 = vadd.f32 %v308, %v309
    %v311 = vrot.slane %v310, 2
    %v312 = vadd.f32 %v310, %v311
    %v313 = vrot.slane %v312, 1
    %v314 = vadd.f32 %v312, %v313
    %v315 = vadd.f32 %v132, %v145
    %v316 = vrot.slane %v315, 4
    %v317 = vadd.f32 %v315, %v316
    %v318 = vrot.slane %v317, 2
    %v319 = vadd.f32 %v317, %v318
    %v320 = vrot.slane %v319, 1
    %v321 = vadd.f32 %v319, %v320
    %v322 = vadd.f32 %v133, %v146
    %v323 = vrot.slane %v322, 4
    %v324 = vadd.f32 %v322, %v323
    %v325 = vrot.slane %v324, 2
    %v326 = vadd.f32 %v324, %v325
    %v327 = vrot.slane %v326, 1
    %v328 = vadd.f32 %v326, %v327
    %v329 = vld [vmem:[#allocation5] sm:$0xff]
    %v330 = vld [vmem:[#allocation5 + $0x8] sm:$0xff]
    %v331 = vld [vmem:[#allocation5 + $0x10] sm:$0xff]
    %v332 = vld [vmem:[#allocation5 + $0x18] sm:$0xff]
    %v333 = vld [vmem:[#allocation5 + $0x20] sm:$0xff]
    %v334 = vld [vmem:[#allocation5 + $0x28] sm:$0xff]
    %v335 = vld [vmem:[#allocation5 + $0x30] sm:$0xff]
    %v336 = vld [vmem:[#allocation5 + $0x38] sm:$0xff]
    %v337 = vld [vmem:[#allocation5 + $0x40] sm:$0xff]
    %v338 = vld [vmem:[#allocation5 + $0x48] sm:$0xff]
    %v339 = vld [vmem:[#allocation5 + $0x50] sm:$0xff]
    %v340 = vld [vmem:[#allocation5 + $0x58] sm:$0xff]
    %v341 = vld [vmem:[#allocation5 + $0x60] sm:$0xff]
    %v342 = vld [vmem:[#allocation5 + $0x68] sm:$0xff]
    %v343 = vld [vmem:[#allocation5 + $0x70] sm:$0xff]
    %v344 = vld [vmem:[#allocation5 + $0x78] sm:$0xff]
    %v345 = vld [vmem:[#allocation5 + $0x80] sm:$0xff]
    %v346 = vld [vmem:[#allocation5 + $0x88] sm:$0xff]
    %v347 = vld [vmem:[#allocation5 + $0x90] sm:$0xff]
    %v348 = vld [vmem:[#allocation5 + $0x98] sm:$0xff]
    %v349 = vld [vmem:[#allocation5 + $0xa0] sm:$0xff]
    %v350 = vld [vmem:[#allocation5 + $0xa8] sm:$0xff]
    %v351 = vld [vmem:[#allocation5 + $0xb0] sm:$0xff]
    %v352 = vld [vmem:[#allocation5 + $0xb8] sm:$0xff]
    %v353 = vld [vmem:[#allocation5 + $0xc0] sm:$0xff]
    %v354 = vld [vmem:[#allocation5 + $0xc8] sm:$0xff]
    %v355 = vld [vmem:[#allocation5 + $0xd0] sm:$0xff]
    %v356 = vld [vmem:[#allocation5 + $0xd8] sm:$0xff]
    %v357 = vld [vmem:[#allocation5 + $0xe0] sm:$0xff]
    %v358 = vld [vmem:[#allocation5 + $0xe8] sm:$0xff]
    %v359 = vld [vmem:[#allocation5 + $0xf0] sm:$0xff]
    %v360 = vld [vmem:[#allocation5 + $0xf8] sm:$0xff]
    %v361 = vld [vmem:[#allocation5 + $0x100] sm:$0xff]
    %v362 = vld [vmem:[#allocation5 + $0x108] sm:$0xff]
    %v363 = vld [vmem:[#allocation5 + $0x110] sm:$0xff]
    %v364 = vld [vmem:[#allocation5 + $0x118] sm:$0xff]
    %v365 = vld [vmem:[#allocation5 + $0x120] sm:$0xff]
    %v366 = vld [vmem:[#allocation5 + $0x128] sm:$0xff]
    %v367 = vld [vmem:[#allocation5 + $0x130] sm:$0xff]
    %v368 = vld [vmem:[#allocation5 + $0x138] sm:$0xff]
    %v369 = vld [vmem:[#allocation5 + $0x140] sm:$0xff]
    %v370 = vld [vmem:[#allocation5 + $0x148] sm:$0xff]
    %v371 = vld [vmem:[#allocation5 + $0x150] sm:$0xff]
    %v372 = vld [vmem:[#allocation5 + $0x158] sm:$0xff]
    %v373 = vld [vmem:[#allocation5 + $0x160] sm:$0xff]
    %v374 = vld [vmem:[#allocation5 + $0x168] sm:$0xff]
    %v375 = vld [vmem:[#allocation5 + $0x170] sm:$0xff]
    %v376 = vld [vmem:[#allocation5 + $0x178] sm:$0xff]
    %v377 = vld [vmem:[#allocation5 + $0x180] sm:$0xff]
    %v378 = vld [vmem:[#allocation5 + $0x188] sm:$0xff]
    %v379 = vld [vmem:[#allocation5 + $0x190] sm:$0xff]
    %v380 = vld [vmem:[#allocation5 + $0x198] sm:$0xff]
    %v381 = vld [vmem:[#allocation5 + $0x1a0] sm:$0xff]
    %v382 = vld [vmem:[#allocation5 + $0x1a8] sm:$0xff]
    %v383 = vld [vmem:[#allocation5 + $0x1b0] sm:$0xff]
    %v384 = vld [vmem:[#allocation5 + $0x1b8] sm:$0xff]
    %v385 = vld [vmem:[#allocation5 + $0x1c0] sm:$0xff]
    %v386 = vld [vmem:[#allocation5 + $0x1c8] sm:$0xff]
    %v387 = vld [vmem:[#allocation5 + $0x1d0] sm:$0xff]
    %v388 = vld [vmem:[#allocation5 + $0x1d8] sm:$0xff]
    %v389 = vld [vmem:[#allocation5 + $0x1e0] sm:$0xff]
    %v390 = vld [vmem:[#allocation5 + $0x1e8] sm:$0xff]
    %v391 = vld [vmem:[#allocation5 + $0x1f0] sm:$0xff]
    %v392 = vld [vmem:[#allocation5 + $0x1f8] sm:$0xff]
    %v393 = vld [vmem:[#allocation5 + $0x200] sm:$0xff]
    %v394 = vld [vmem:[#allocation5 + $0x208] sm:$0xff]
    %v395 = vld [vmem:[#allocation5 + $0x210] sm:$0xff]
    %v396 = vld [vmem:[#allocation5 + $0x218] sm:$0xff]
    %v397 = vld [vmem:[#allocation5 + $0x220] sm:$0xff]
    %v398 = vld [vmem:[#allocation5 + $0x228] sm:$0xff]
    %v399 = vld [vmem:[#allocation5 + $0x230] sm:$0xff]
    %v400 = vld [vmem:[#allocation5 + $0x238] sm:$0xff]
    %v401 = vld [vmem:[#allocation5 + $0x240] sm:$0xff]
    %v402 = vld [vmem:[#allocation5 + $0x248] sm:$0xff]
    %v403 = vld [vmem:[#allocation5 + $0x250] sm:$0xff]
    %v404 = vld [vmem:[#allocation5 + $0x258] sm:$0xff]
    %v405 = vld [vmem:[#allocation5 + $0x260] sm:$0xff]
    %v406 = vld [vmem:[#allocation5 + $0x268] sm:$0xff]
    %v407 = vld [vmem:[#allocation5 + $0x270] sm:$0xff]
    %v408 = vld [vmem:[#allocation5 + $0x278] sm:$0xff]
    %v409 = vld [vmem:[#allocation5 + $0x280] sm:$0xff]
    %v410 = vld [vmem:[#allocation5 + $0x288] sm:$0xff]
    %v411 = vld [vmem:[#allocation5 + $0x290] sm:$0xff]
    %v412 = vld [vmem:[#allocation5 + $0x298] sm:$0xff]
    %v413 = vld [vmem:[#allocation5 + $0x2a0] sm:$0xff]
    %v414 = vld [vmem:[#allocation5 + $0x2a8] sm:$0xff]
    %v415 = vld [vmem:[#allocation5 + $0x2b0] sm:$0xff]
    %v416 = vld [vmem:[#allocation5 + $0x2b8] sm:$0xff]
    %v417 = vld [vmem:[#allocation5 + $0x2c0] sm:$0xff]
    %v418 = vld [vmem:[#allocation5 + $0x2c8] sm:$0xff]
    %v419 = vld [vmem:[#allocation5 + $0x2d0] sm:$0xff]
    %v420 = vld [vmem:[#allocation5 + $0x2d8] sm:$0xff]
    %v421 = vld [vmem:[#allocation5 + $0x2e0] sm:$0xff]
    %v422 = vld [vmem:[#allocation5 + $0x2e8] sm:$0xff]
    %v423 = vld [vmem:[#allocation5 + $0x2f0] sm:$0xff]
    %v424 = vld [vmem:[#allocation5 + $0x2f8] sm:$0xff]
    %v425 = vld [vmem:[#allocation5 + $0x300] sm:$0xff]
    %v426 = vld [vmem:[#allocation5 + $0x308] sm:$0xff]
    %v427 = vld [vmem:[#allocation5 + $0x310] sm:$0xff]
    %v428 = vld [vmem:[#allocation5 + $0x318] sm:$0xff]
    %v429 = vld [vmem:[#allocation5 + $0x320] sm:$0xff]
    %v430 = vld [vmem:[#allocation5 + $0x328] sm:$0xff]
    %v431 = vld [vmem:[#allocation5 + $0x330] sm:$0xff]
    %v432 = vld [vmem:[#allocation5 + $0x338] sm:$0xff]
    %v433 = vld [vmem:[#allocation5 + $0x340] sm:$0xff]
    %v434 = vld [vmem:[#allocation5 + $0x348] sm:$0xff]
    %v435 = vld [vmem:[#allocation5 + $0x350] sm:$0xff]
    %v436 = vld [vmem:[#allocation5 + $0x358] sm:$0xff]
    %v437 = vld [vmem:[#allocation5 + $0x360] sm:$0xff]
    %v438 = vld [vmem:[#allocation5 + $0x368] sm:$0xff]
    %v439 = vld [vmem:[#allocation5 + $0x370] sm:$0xff]
    %v440 = vld [vmem:[#allocation5 + $0x378] sm:$0xff]
    %v441 = vld [vmem:[#allocation5 + $0x380] sm:$0xff]
    %v442 = vld [vmem:[#allocation5 + $0x388] sm:$0xff]
    %v443 = vld [vmem:[#allocation5 + $0x390] sm:$0xff]
    %v444 = vld [vmem:[#allocation5 + $0x398] sm:$0xff]
    %v445 = vld [vmem:[#allocation5 + $0x3a0] sm:$0xff]
    %v446 = vld [vmem:[#allocation5 + $0x3a8] sm:$0xff]
    %v447 = vld [vmem:[#allocation5 + $0x3b0] sm:$0xff]
    %v448 = vld [vmem:[#allocation5 + $0x3b8] sm:$0xff]
    %v449 = vld [vmem:[#allocation5 + $0x3c0] sm:$0xff]
    %v450 = vld [vmem:[#allocation5 + $0x3c8] sm:$0xff]
    %v451 = vld [vmem:[#allocation5 + $0x3d0] sm:$0xff]
    %v452 = vld [vmem:[#allocation5 + $0x3d8] sm:$0xff]
    %v453 = vld [vmem:[#allocation5 + $0x3e0] sm:$0xff]
    %v454 = vld [vmem:[#allocation5 + $0x3e8] sm:$0xff]
    %v455 = vld [vmem:[#allocation5 + $0x3f0] sm:$0xff]
    %v456 = vld [vmem:[#allocation5 + $0x3f8] sm:$0xff]
    %v457 = vld [vmem:[#allocation5 + $0x400] sm:$0xff]
    %v458 = vld [vmem:[#allocation5 + $0x408] sm:$0xff]
    %v459 = vld [vmem:[#allocation5 + $0x410] sm:$0xff]
    %v460 = vld [vmem:[#allocation5 + $0x418] sm:$0xff]
    %v461 = vld [vmem:[#allocation5 + $0x420] sm:$0xff]
    %v462 = vld [vmem:[#allocation5 + $0x428] sm:$0xff]
    %v463 = vld [vmem:[#allocation5 + $0x430] sm:$0xff]
    %v464 = vld [vmem:[#allocation5 + $0x438] sm:$0xff]
    %v465 = vld [vmem:[#allocation5 + $0x440] sm:$0xff]
    %v466 = vld [vmem:[#allocation5 + $0x448] sm:$0xff]
    %v467 = vld [vmem:[#allocation5 + $0x450] sm:$0xff]
    %v468 = vld [vmem:[#allocation5 + $0x458] sm:$0xff]
    %v469 = vld [vmem:[#allocation5 + $0x460] sm:$0xff]
    %v470 = vld [vmem:[#allocation5 + $0x468] sm:$0xff]
    %v471 = vld [vmem:[#allocation5 + $0x470] sm:$0xff]
    %v472 = vld [vmem:[#allocation5 + $0x478] sm:$0xff]
    %v473 = vld [vmem:[#allocation5 + $0x480] sm:$0xff]
    %v474 = vld [vmem:[#allocation5 + $0x488] sm:$0xff]
    %v475 = vld [vmem:[#allocation5 + $0x490] sm:$0xff]
    %v476 = vld [vmem:[#allocation5 + $0x498] sm:$0xff]
    %v477 = vld [vmem:[#allocation5 + $0x4a0] sm:$0xff]
    %v478 = vld [vmem:[#allocation5 + $0x4a8] sm:$0xff]
    %v479 = vld [vmem:[#allocation5 + $0x4b0] sm:$0xff]
    %v480 = vld [vmem:[#allocation5 + $0x4b8] sm:$0xff]
    %v481 = vld [vmem:[#allocation5 + $0x4c0] sm:$0xff]
    %v482 = vld [vmem:[#allocation5 + $0x4c8] sm:$0xff]
    %v483 = vld [vmem:[#allocation5 + $0x4d0] sm:$0xff]
    %v484 = vld [vmem:[#allocation5 + $0x4d8] sm:$0xff]
    %v485 = vld [vmem:[#allocation5 + $0x4e0] sm:$0xff]
    %v486 = vld [vmem:[#allocation5 + $0x4e8] sm:$0xff]
    %v487 = vld [vmem:[#allocation5 + $0x4f0] sm:$0xff]
    %v488 = vld [vmem:[#allocation5 + $0x4f8] sm:$0xff]
    %v489 = vld [vmem:[#allocation5 + $0x500] sm:$0xff]
    %v490 = vld [vmem:[#allocation5 + $0x508] sm:$0xff]
    %v491 = vld [vmem:[#allocation5 + $0x510] sm:$0xff]
    %v492 = vld [vmem:[#allocation5 + $0x518] sm:$0xff]
    %v493 = vld [vmem:[#allocation5 + $0x520] sm:$0xff]
    %v494 = vld [vmem:[#allocation5 + $0x528] sm:$0xff]
    %v495 = vld [vmem:[#allocation5 + $0x530] sm:$0xff]
    %v496 = vld [vmem:[#allocation5 + $0x538] sm:$0xff]
    %v497 = vld [vmem:[#allocation5 + $0x540] sm:$0xff]
    %v498 = vld [vmem:[#allocation5 + $0x548] sm:$0xff]
    %v499 = vld [vmem:[#allocation5 + $0x550] sm:$0xff]
    %v500 = vld [vmem:[#allocation5 + $0x558] sm:$0xff]
    %v501 = vld [vmem:[#allocation5 + $0x560] sm:$0xff]
    %v502 = vld [vmem:[#allocation5 + $0x568] sm:$0xff]
    %v503 = vld [vmem:[#allocation5 + $0x570] sm:$0xff]
    %v504 = vld [vmem:[#allocation5 + $0x578] sm:$0xff]
    %v505 = vld [vmem:[#allocation5 + $0x580] sm:$0xff]
    %v506 = vld [vmem:[#allocation5 + $0x588] sm:$0xff]
    %v507 = vld [vmem:[#allocation5 + $0x590] sm:$0xff]
    %v508 = vld [vmem:[#allocation5 + $0x598] sm:$0xff]
    %v509 = vld [vmem:[#allocation5 + $0x5a0] sm:$0xff]
    %v510 = vld [vmem:[#allocation5 + $0x5a8] sm:$0xff]
    %v511 = vld [vmem:[#allocation5 + $0x5b0] sm:$0xff]
    %v512 = vld [vmem:[#allocation5 + $0x5b8] sm:$0xff]
    %v513 = vld [vmem:[#allocation5 + $0x5c0] sm:$0xff]
    %v514 = vld [vmem:[#allocation5 + $0x5c8] sm:$0xff]
    %v515 = vld [vmem:[#allocation5 + $0x5d0] sm:$0xff]
    %v516 = vld [vmem:[#allocation5 + $0x5d8] sm:$0xff]
    %v517 = vld [vmem:[#allocation5 + $0x5e0] sm:$0xff]
    %v518 = vld [vmem:[#allocation5 + $0x5e8] sm:$0xff]
    %v519 = vld [vmem:[#allocation5 + $0x5f0] sm:$0xff]
    %v520 = vld [vmem:[#allocation5 + $0x5f8] sm:$0xff]
    %v521 = vld [vmem:[#allocation5 + $0x600] sm:$0xff]
    %v522 = vld [vmem:[#allocation5 + $0x608] sm:$0xff]
    %v523 = vld [vmem:[#allocation5 + $0x610] sm:$0xff]
    %v524 = vld [vmem:[#allocation5 + $0x618] sm:$0xff]
    %v525 = vld [vmem:[#allocation5 + $0x620] sm:$0xff]
    %v526 = vld [vmem:[#allocation5 + $0x628] sm:$0xff]
    %v527 = vld [vmem:[#allocation5 + $0x630] sm:$0xff]
    %v528 = vld [vmem:[#allocation5 + $0x638] sm:$0xff]
    %v529 = vld [vmem:[#allocation5 + $0x640] sm:$0xff]
    %v530 = vld [vmem:[#allocation5 + $0x648] sm:$0xff]
    %v531 = vld [vmem:[#allocation5 + $0x650] sm:$0xff]
    %v532 = vld [vmem:[#allocation5 + $0x658] sm:$0xff]
    %v533 = vld [vmem:[#allocation5 + $0x660] sm:$0xff]
    %v534 = vld [vmem:[#allocation5 + $0x668] sm:$0xff]
    %v535 = vld [vmem:[#allocation5 + $0x670] sm:$0xff]
    %v536 = vld [vmem:[#allocation5 + $0x678] sm:$0xff]
    %v537 = vld [vmem:[%s2] sm:$0x1]
    %v539 = vlaneseq
    %v540 = vshrl.u32 %v539, 7
    %v541 = vsub.s32 0, %v540
    %v542 = vrot.slane %v537, %v541
    %vm570 = vcmask 1041409
    %v571 = vsel %vm570, %v244, %v153
    %v572 = vsel %vm570, %v251, %v160
    %v573 = vsel %vm570, %v258, %v167
    %v574 = vsel %vm570, %v265, %v174
    %v575 = vsel %vm570, %v272, %v181
    %v576 = vsel %vm570, %v279, %v188
    %v577 = vsel %vm570, %v286, %v195
    %v578 = vsel %vm570, %v293, %v202
    %v579 = vsel %vm570, %v300, %v209
    %v580 = vsel %vm570, %v307, %v216
    %v581 = vsel %vm570, %v314, %v223
    %v582 = vsel %vm570, %v321, %v230
    %v583 = vsel %vm570, %v328, %v237
    %597 = vmatprep.subr.mxu0 0.0
    %598 = vmatpush1.msra.mxu0 %v329
    %599 = vmatprep.subr.mxu0 0.0
    %600 = vmatpush1.msra.mxu0 %v330
    %601 = vmatprep.subr.mxu0 0.0
    %602 = vmatpush1.msra.mxu0 %v331
    %603 = vmatprep.subr.mxu0 0.0
    %604 = vmatpush1.msra.mxu0 %v332
    %605 = vmatprep.subr.mxu0 0.0
    %606 = vmatpush1.msra.mxu0 %v333
    %607 = vmatprep.subr.mxu0 0.0
    %608 = vmatpush1.msra.mxu0 %v334
    %609 = vmatprep.subr.mxu0 0.0
    %610 = vmatpush1.msra.mxu0 %v335
    %611 = vmatprep.subr.mxu0 0.0
    %612 = vmatpush1.msra.mxu0 %v336
    %613 = vmatprep.subr.mxu0 0.0
    %614 = vmatpush1.msra.mxu0 %v337
    %615 = vmatprep.subr.mxu0 0.0
    %616 = vmatpush1.msra.mxu0 %v338
    %617 = vmatprep.subr.mxu0 0.0
    %618 = vmatpush1.msra.mxu0 %v339
    %619 = vmatprep.subr.mxu0 0.0
    %620 = vmatpush1.msra.mxu0 %v340
    %621 = vmatprep.subr.mxu0 0.0
    %622 = vmatpush1.msra.mxu0 %v341
    %623 = vmatprep.subr.mxu0 0.0
    %624 = vmatpush1.msra.mxu0 %v342
    %625 = vmatprep.subr.mxu0 0.0
    %626 = vmatpush1.msra.mxu0 %v343
    %627 = vmatprep.subr.mxu0 0.0
    %628 = vmatpush1.msra.mxu0 %v344
    %629 = vmatprep.subr.mxu0 0.0
    %630 = vmatpush1.msra.mxu0 %v345
    %631 = vmatprep.subr.mxu0 0.0
    %632 = vmatpush1.msra.mxu0 %v346
    %633 = vmatprep.subr.mxu0 0.0
    %634 = vmatpush1.msra.mxu0 %v347
    %635 = vmatprep.subr.mxu0 0.0
    %636 = vmatpush1.msra.mxu0 %v348
    %637 = vmatprep.subr.mxu0 0.0
    %638 = vmatpush1.msra.mxu0 %v349
    %639 = vmatprep.subr.mxu0 0.0
    %640 = vmatpush1.msra.mxu0 %v350
    %641 = vmatprep.subr.mxu0 0.0
    %642 = vmatpush1.msra.mxu0 %v351
    %643 = vmatprep.subr.mxu0 0.0
    %644 = vmatpush1.msra.mxu0 %v352
    %645 = vmatprep.subr.mxu0 0.0
    %646 = vmatpush1.msra.mxu0 %v353
    %647 = vmatprep.subr.mxu0 0.0
    %648 = vmatpush1.msra.mxu0 %v354
    %649 = vmatprep.subr.mxu0 0.0
    %650 = vmatpush1.msra.mxu0 %v355
    %651 = vmatprep.subr.mxu0 0.0
    %652 = vmatpush1.msra.mxu0 %v356
    %653 = vmatprep.subr.mxu0 0.0
    %654 = vmatpush1.msra.mxu0 %v357
    %655 = vmatprep.subr.mxu0 0.0
    %656 = vmatpush1.msra.mxu0 %v358
    %657 = vmatprep.subr.mxu0 0.0
    %658 = vmatpush1.msra.mxu0 %v359
    %659 = vmatprep.subr.mxu0 0.0
    %660 = vmatpush1.msra.mxu0 %v360
    %661 = vmatprep.mubr.f32.mxu0 %v572
    %662 = vmatmul.mubr.f32.gmra.mrb[0].mxu0 %v571
    %v663 = vpop.f32.mrb[0].mxu0
    %v664 = vadd.f32 %v542, %v663
    %v665 = vpop.f32.mrb[0].mxu0
    %666 = vdwg.mxu0
    %667 = vmatprep.subr.mxu0 0.0
    %668 = vmatpush1.msra.mxu0 %v361
    %669 = vmatprep.subr.mxu0 0.0
    %670 = vmatpush1.msra.mxu0 %v362
    %671 = vmatprep.subr.mxu0 0.0
    %672 = vmatpush1.msra.mxu0 %v363
    %673 = vmatprep.subr.mxu0 0.0
    %674 = vmatpush1.msra.mxu0 %v364
    %675 = vmatprep.subr.mxu0 0.0
    %676 = vmatpush1.msra.mxu0 %v365
    %677 = vmatprep.subr.mxu0 0.0
    %678 = vmatpush1.msra.mxu0 %v366
    %679 = vmatprep.subr.mxu0 0.0
    %680 = vmatpush1.msra.mxu0 %v367
    %681 = vmatprep.subr.mxu0 0.0
    %682 = vmatpush1.msra.mxu0 %v368
    %683 = vmatprep.subr.mxu0 0.0
    %684 = vmatpush1.msra.mxu0 %v369
    %685 = vmatprep.subr.mxu0 0.0
    %686 = vmatpush1.msra.mxu0 %v370
    %687 = vmatprep.subr.mxu0 0.0
    %688 = vmatpush1.msra.mxu0 %v371
    %689 = vmatprep.subr.mxu0 0.0
    %690 = vmatpush1.msra.mxu0 %v372
    %691 = vmatprep.subr.mxu0 0.0
    %692 = vmatpush1.msra.mxu0 %v373
    %693 = vmatprep.subr.mxu0 0.0
    %694 = vmatpush1.msra.mxu0 %v374
    %695 = vmatprep.subr.mxu0 0.0
    %696 = vmatpush1.msra.mxu0 %v375
    %697 = vmatprep.subr.mxu0 0.0
    %698 = vmatpush1.msra.mxu0 %v376
    %699 = vmatprep.subr.mxu0 0.0
    %700 = vmatpush1.msra.mxu0 %v377
    %701 = vmatprep.subr.mxu0 0.0
    %702 = vmatpush1.msra.mxu0 %v378
    %703 = vmatprep.subr.mxu0 0.0
    %704 = vmatpush1.msra.mxu0 %v379
    %705 = vmatprep.subr.mxu0 0.0
    %706 = vmatpush1.msra.mxu0 %v380
    %707 = vmatprep.subr.mxu0 0.0
    %708 = vmatpush1.msra.mxu0 %v381
    %709 = vmatprep.subr.mxu0 0.0
    %710 = vmatpush1.msra.mxu0 %v382
    %711 = vmatprep.subr.mxu0 0.0
    %712 = vmatpush1.msra.mxu0 %v383
    %713 = vmatprep.subr.mxu0 0.0
    %714 = vmatpush1.msra.mxu0 %v384
    %715 = vmatprep.subr.mxu0 0.0
    %716 = vmatpush1.msra.mxu0 %v385
    %717 = vmatprep.subr.mxu0 0.0
    %718 = vmatpush1.msra.mxu0 %v386
    %719 = vmatprep.subr.mxu0 0.0
    %720 = vmatpush1.msra.mxu0 %v387
    %721 = vmatprep.subr.mxu0 0.0
    %722 = vmatpush1.msra.mxu0 %v388
    %723 = vmatprep.subr.mxu0 0.0
    %724 = vmatpush1.msra.mxu0 %v389
    %725 = vmatprep.subr.mxu0 0.0
    %726 = vmatpush1.msra.mxu0 %v390
    %727 = vmatprep.subr.mxu0 0.0
    %728 = vmatpush1.msra.mxu0 %v391
    %729 = vmatprep.subr.mxu0 0.0
    %730 = vmatpush1.msra.mxu0 %v392
    %731 = vmatprep.mubr.f32.mxu0 %v574
    %732 = vmatmul.mubr.f32.gmra.mrb[0].mxu0 %v573
    %v733 = vpop.f32.mrb[0].mxu0
    %v734 = vadd.f32 %v664, %v733
    %v735 = vpop.f32.mrb[0].mxu0
    %736 = vdwg.mxu0
    %737 = vmatprep.subr.mxu0 0.0
    %738 = vmatpush1.msra.mxu0 %v393
    %739 = vmatprep.subr.mxu0 0.0
    %740 = vmatpush1.msra.mxu0 %v394
    %741 = vmatprep.subr.mxu0 0.0
    %742 = vmatpush1.msra.mxu0 %v395
    %743 = vmatprep.subr.mxu0 0.0
    %744 = vmatpush1.msra.mxu0 %v396
    %745 = vmatprep.subr.mxu0 0.0
    %746 = vmatpush1.msra.mxu0 %v397
    %747 = vmatprep.subr.mxu0 0.0
    %748 = vmatpush1.msra.mxu0 %v398
    %749 = vmatprep.subr.mxu0 0.0
    %750 = vmatpush1.msra.mxu0 %v399
    %751 = vmatprep.subr.mxu0 0.0
    %752 = vmatpush1.msra.mxu0 %v400
    %753 = vmatprep.subr.mxu0 0.0
    %754 = vmatpush1.msra.mxu0 %v401
    %755 = vmatprep.subr.mxu0 0.0
    %756 = vmatpush1.msra.mxu0 %v402
    %757 = vmatprep.subr.mxu0 0.0
    %758 = vmatpush1.msra.mxu0 %v403
    %759 = vmatprep.subr.mxu0 0.0
    %760 = vmatpush1.msra.mxu0 %v404
    %761 = vmatprep.subr.mxu0 0.0
    %762 = vmatpush1.msra.mxu0 %v405
    %763 = vmatprep.subr.mxu0 0.0
    %764 = vmatpush1.msra.mxu0 %v406
    %765 = vmatprep.subr.mxu0 0.0
    %766 = vmatpush1.msra.mxu0 %v407
    %767 = vmatprep.subr.mxu0 0.0
    %768 = vmatpush1.msra.mxu0 %v408
    %769 = vmatprep.subr.mxu0 0.0
    %770 = vmatpush1.msra.mxu0 %v409
    %771 = vmatprep.subr.mxu0 0.0
    %772 = vmatpush1.msra.mxu0 %v410
    %773 = vmatprep.subr.mxu0 0.0
    %774 = vmatpush1.msra.mxu0 %v411
    %775 = vmatprep.subr.mxu0 0.0
    %776 = vmatpush1.msra.mxu0 %v412
    %777 = vmatprep.subr.mxu0 0.0
    %778 = vmatpush1.msra.mxu0 %v413
    %779 = vmatprep.subr.mxu0 0.0
    %780 = vmatpush1.msra.mxu0 %v414
    %781 = vmatprep.subr.mxu0 0.0
    %782 = vmatpush1.msra.mxu0 %v415
    %783 = vmatprep.subr.mxu0 0.0
    %784 = vmatpush1.msra.mxu0 %v416
    %785 = vmatprep.subr.mxu0 0.0
    %786 = vmatpush1.msra.mxu0 %v417
    %787 = vmatprep.subr.mxu0 0.0
    %788 = vmatpush1.msra.mxu0 %v418
    %789 = vmatprep.subr.mxu0 0.0
    %790 = vmatpush1.msra.mxu0 %v419
    %791 = vmatprep.subr.mxu0 0.0
    %792 = vmatpush1.msra.mxu0 %v420
    %793 = vmatprep.subr.mxu0 0.0
    %794 = vmatpush1.msra.mxu0 %v421
    %795 = vmatprep.subr.mxu0 0.0
    %796 = vmatpush1.msra.mxu0 %v422
    %797 = vmatprep.subr.mxu0 0.0
    %798 = vmatpush1.msra.mxu0 %v423
    %799 = vmatprep.subr.mxu0 0.0
    %800 = vmatpush1.msra.mxu0 %v424
    %801 = vmatprep.mubr.f32.mxu0 %v576
    %802 = vmatmul.mubr.f32.gmra.mrb[0].mxu0 %v575
    %v803 = vpop.f32.mrb[0].mxu0
    %v804 = vadd.f32 %v734, %v803
    %v805 = vpop.f32.mrb[0].mxu0
    %806 = vdwg.mxu0
    %807 = vmatprep.subr.mxu0 0.0
    %808 = vmatpush1.msra.mxu0 %v425
    %809 = vmatprep.subr.mxu0 0.0
    %810 = vmatpush1.msra.mxu0 %v426
    %811 = vmatprep.subr.mxu0 0.0
    %812 = vmatpush1.msra.mxu0 %v427
    %813 = vmatprep.subr.mxu0 0.0
    %814 = vmatpush1.msra.mxu0 %v428
    %815 = vmatprep.subr.mxu0 0.0
    %816 = vmatpush1.msra.mxu0 %v429
    %817 = vmatprep.subr.mxu0 0.0
    %818 = vmatpush1.msra.mxu0 %v430
    %819 = vmatprep.subr.mxu0 0.0
    %820 = vmatpush1.msra.mxu0 %v431
    %821 = vmatprep.subr.mxu0 0.0
    %822 = vmatpush1.msra.mxu0 %v432
    %823 = vmatprep.subr.mxu0 0.0
    %824 = vmatpush1.msra.mxu0 %v433
    %825 = vmatprep.subr.mxu0 0.0
    %826 = vmatpush1.msra.mxu0 %v434
    %827 = vmatprep.subr.mxu0 0.0
    %828 = vmatpush1.msra.mxu0 %v435
    %829 = vmatprep.subr.mxu0 0.0
    %830 = vmatpush1.msra.mxu0 %v436
    %831 = vmatprep.subr.mxu0 0.0
    %832 = vmatpush1.msra.mxu0 %v437
    %833 = vmatprep.subr.mxu0 0.0
    %834 = vmatpush1.msra.mxu0 %v438
    %835 = vmatprep.subr.mxu0 0.0
    %836 = vmatpush1.msra.mxu0 %v439
    %837 = vmatprep.subr.mxu0 0.0
    %838 = vmatpush1.msra.mxu0 %v440
    %839 = vmatprep.subr.mxu0 0.0
    %840 = vmatpush1.msra.mxu0 %v441
    %841 = vmatprep.subr.mxu0 0.0
    %842 = vmatpush1.msra.mxu0 %v442
    %843 = vmatprep.subr.mxu0 0.0
    %844 = vmatpush1.msra.mxu0 %v443
    %845 = vmatprep.subr.mxu0 0.0
    %846 = vmatpush1.msra.mxu0 %v444
    %847 = vmatprep.subr.mxu0 0.0
    %848 = vmatpush1.msra.mxu0 %v445
    %849 = vmatprep.subr.mxu0 0.0
    %850 = vmatpush1.msra.mxu0 %v446
    %851 = vmatprep.subr.mxu0 0.0
    %852 = vmatpush1.msra.mxu0 %v447
    %853 = vmatprep.subr.mxu0 0.0
    %854 = vmatpush1.msra.mxu0 %v448
    %855 = vmatprep.subr.mxu0 0.0
    %856 = vmatpush1.msra.mxu0 %v449
    %857 = vmatprep.subr.mxu0 0.0
    %858 = vmatpush1.msra.mxu0 %v450
    %859 = vmatprep.subr.mxu0 0.0
    %860 = vmatpush1.msra.mxu0 %v451
    %861 = vmatprep.subr.mxu0 0.0
    %862 = vmatpush1.msra.mxu0 %v452
    %863 = vmatprep.subr.mxu0 0.0
    %864 = vmatpush1.msra.mxu0 %v453
    %865 = vmatprep.subr.mxu0 0.0
    %866 = vmatpush1.msra.mxu0 %v454
    %867 = vmatprep.subr.mxu0 0.0
    %868 = vmatpush1.msra.mxu0 %v455
    %869 = vmatprep.subr.mxu0 0.0
    %870 = vmatpush1.msra.mxu0 %v456
    %871 = vmatprep.mubr.f32.mxu0 %v578
    %872 = vmatmul.mubr.f32.gmra.mrb[0].mxu0 %v577
    %v873 = vpop.f32.mrb[0].mxu0
    %v874 = vadd.f32 %v804, %v873
    %v875 = vpop.f32.mrb[0].mxu0
    %876 = vdwg.mxu0
    %877 = vmatprep.subr.mxu0 0.0
    %878 = vmatpush1.msra.mxu0 %v457
    %879 = vmatprep.subr.mxu0 0.0
    %880 = vmatpush1.msra.mxu0 %v458
    %881 = vmatprep.subr.mxu0 0.0
    %882 = vmatpush1.msra.mxu0 %v459
    %883 = vmatprep.subr.mxu0 0.0
    %884 = vmatpush1.msra.mxu0 %v460
    %885 = vmatprep.subr.mxu0 0.0
    %886 = vmatpush1.msra.mxu0 %v461
    %887 = vmatprep.subr.mxu0 0.0
    %888 = vmatpush1.msra.mxu0 %v462
    %889 = vmatprep.subr.mxu0 0.0
    %890 = vmatpush1.msra.mxu0 %v463
    %891 = vmatprep.subr.mxu0 0.0
    %892 = vmatpush1.msra.mxu0 %v464
    %893 = vmatprep.subr.mxu0 0.0
    %894 = vmatpush1.msra.mxu0 %v465
    %895 = vmatprep.subr.mxu0 0.0
    %896 = vmatpush1.msra.mxu0 %v466
    %897 = vmatprep.subr.mxu0 0.0
    %898 = vmatpush1.msra.mxu0 %v467
    %899 = vmatprep.subr.mxu0 0.0
    %900 = vmatpush1.msra.mxu0 %v468
    %901 = vmatprep.subr.mxu0 0.0
    %902 = vmatpush1.msra.mxu0 %v469
    %903 = vmatprep.subr.mxu0 0.0
    %904 = vmatpush1.msra.mxu0 %v470
    %905 = vmatprep.subr.mxu0 0.0
    %906 = vmatpush1.msra.mxu0 %v471
    %907 = vmatprep.subr.mxu0 0.0
    %908 = vmatpush1.msra.mxu0 %v472
    %909 = vmatprep.subr.mxu0 0.0
    %910 = vmatpush1.msra.mxu0 %v473
    %911 = vmatprep.subr.mxu0 0.0
    %912 = vmatpush1.msra.mxu0 %v474
    %913 = vmatprep.subr.mxu0 0.0
    %914 = vmatpush1.msra.mxu0 %v475
    %915 = vmatprep.subr.mxu0 0.0
    %916 = vmatpush1.msra.mxu0 %v476
    %917 = vmatprep.subr.mxu0 0.0
    %918 = vmatpush1.msra.mxu0 %v477
    %919 = vmatprep.subr.mxu0 0.0
    %920 = vmatpush1.msra.mxu0 %v478
    %921 = vmatprep.subr.mxu0 0.0
    %922 = vmatpush1.msra.mxu0 %v479
    %923 = vmatprep.subr.mxu0 0.0
    %924 = vmatpush1.msra.mxu0 %v480
    %925 = vmatprep.subr.mxu0 0.0
    %926 = vmatpush1.msra.mxu0 %v481
    %927 = vmatprep.subr.mxu0 0.0
    %928 = vmatpush1.msra.mxu0 %v482
    %929 = vmatprep.subr.mxu0 0.0
    %930 = vmatpush1.msra.mxu0 %v483
    %931 = vmatprep.subr.mxu0 0.0
    %932 = vmatpush1.msra.mxu0 %v484
    %933 = vmatprep.subr.mxu0 0.0
    %934 = vmatpush1.msra.mxu0 %v485
    %935 = vmatprep.subr.mxu0 0.0
    %936 = vmatpush1.msra.mxu0 %v486
    %937 = vmatprep.subr.mxu0 0.0
    %938 = vmatpush1.msra.mxu0 %v487
    %939 = vmatprep.subr.mxu0 0.0
    %940 = vmatpush1.msra.mxu0 %v488
    %941 = vmatprep.mubr.f32.mxu0 %v580
    %942 = vmatmul.mubr.f32.gmra.mrb[0].mxu0 %v579
    %v943 = vpop.f32.mrb[0].mxu0
    %v944 = vadd.f32 %v874, %v943
    %v945 = vpop.f32.mrb[0].mxu0
    %946 = vdwg.mxu0
    %947 = vmatprep.subr.mxu0 0.0
    %948 = vmatpush1.msra.mxu0 %v489
    %949 = vmatprep.subr.mxu0 0.0
    %950 = vmatpush1.msra.mxu0 %v490
    %951 = vmatprep.subr.mxu0 0.0
    %952 = vmatpush1.msra.mxu0 %v491
    %953 = vmatprep.subr.mxu0 0.0
    %954 = vmatpush1.msra.mxu0 %v492
    %955 = vmatprep.subr.mxu0 0.0
    %956 = vmatpush1.msra.mxu0 %v493
    %957 = vmatprep.subr.mxu0 0.0
    %958 = vmatpush1.msra.mxu0 %v494
    %959 = vmatprep.subr.mxu0 0.0
    %960 = vmatpush1.msra.mxu0 %v495
    %961 = vmatprep.subr.mxu0 0.0
    %962 = vmatpush1.msra.mxu0 %v496
    %963 = vmatprep.subr.mxu0 0.0
    %964 = vmatpush1.msra.mxu0 %v497
    %965 = vmatprep.subr.mxu0 0.0
    %966 = vmatpush1.msra.mxu0 %v498
    %967 = vmatprep.subr.mxu0 0.0
    %968 = vmatpush1.msra.mxu0 %v499
    %969 = vmatprep.subr.mxu0 0.0
    %970 = vmatpush1.msra.mxu0 %v500
    %971 = vmatprep.subr.mxu0 0.0
    %972 = vmatpush1.msra.mxu0 %v501
    %973 = vmatprep.subr.mxu0 0.0
    %974 = vmatpush1.msra.mxu0 %v502
    %975 = vmatprep.subr.mxu0 0.0
    %976 = vmatpush1.msra.mxu0 %v503
    %977 = vmatprep.subr.mxu0 0.0
    %978 = vmatpush1.msra.mxu0 %v504
    %979 = vmatprep.subr.mxu0 0.0
    %980 = vmatpush1.msra.mxu0 %v505
    %981 = vmatprep.subr.mxu0 0.0
    %982 = vmatpush1.msra.mxu0 %v506
    %983 = vmatprep.subr.mxu0 0.0
    %984 = vmatpush1.msra.mxu0 %v507
    %985 = vmatprep.subr.mxu0 0.0
    %986 = vmatpush1.msra.mxu0 %v508
    %987 = vmatprep.subr.mxu0 0.0
    %988 = vmatpush1.msra.mxu0 %v509
    %989 = vmatprep.subr.mxu0 0.0
    %990 = vmatpush1.msra.mxu0 %v510
    %991 = vmatprep.subr.mxu0 0.0
    %992 = vmatpush1.msra.mxu0 %v511
    %993 = vmatprep.subr.mxu0 0.0
    %994 = vmatpush1.msra.mxu0 %v512
    %995 = vmatprep.subr.mxu0 0.0
    %996 = vmatpush1.msra.mxu0 %v513
    %997 = vmatprep.subr.mxu0 0.0
    %998 = vmatpush1.msra.mxu0 %v514
    %999 = vmatprep.subr.mxu0 0.0
    %1000 = vmatpush1.msra.mxu0 %v515
    %1001 = vmatprep.subr.mxu0 0.0
    %1002 = vmatpush1.msra.mxu0 %v516
    %1003 = vmatprep.subr.mxu0 0.0
    %1004 = vmatpush1.msra.mxu0 %v517
    %1005 = vmatprep.subr.mxu0 0.0
    %1006 = vmatpush1.msra.mxu0 %v518
    %1007 = vmatprep.subr.mxu0 0.0
    %1008 = vmatpush1.msra.mxu0 %v519
    %1009 = vmatprep.subr.mxu0 0.0
    %1010 = vmatpush1.msra.mxu0 %v520
    %1011 = vmatprep.mubr.f32.mxu0 %v582
    %1012 = vmatmul.mubr.f32.gmra.mrb[0].mxu0 %v581
    %v1013 = vpop.f32.mrb[0].mxu0
    %v1014 = vadd.f32 %v944, %v1013
    %v1015 = vpop.f32.mrb[0].mxu0
    %1016 = vdwg.mxu0
    %1017 = vmatprep.subr.mxu0 0.0
    %1018 = vmatpush1.msra.mxu0 %v521
    %1019 = vmatprep.subr.mxu0 0.0
    %1020 = vmatpush1.msra.mxu0 %v522
    %1021 = vmatprep.subr.mxu0 0.0
    %1022 = vmatpush1.msra.mxu0 %v523
    %1023 = vmatprep.subr.mxu0 0.0
    %1024 = vmatpush1.msra.mxu0 %v524
    %1025 = vmatprep.subr.mxu0 0.0
    %1026 = vmatpush1.msra.mxu0 %v525
    %1027 = vmatprep.subr.mxu0 0.0
    %1028 = vmatpush1.msra.mxu0 %v526
    %1029 = vmatprep.subr.mxu0 0.0
    %1030 = vmatpush1.msra.mxu0 %v527
    %1031 = vmatprep.subr.mxu0 0.0
    %1032 = vmatpush1.msra.mxu0 %v528
    %1033 = vmatprep.subr.mxu0 0.0
    %1034 = vmatpush1.msra.mxu0 %v529
    %1035 = vmatprep.subr.mxu0 0.0
    %1036 = vmatpush1.msra.mxu0 %v530
    %1037 = vmatprep.subr.mxu0 0.0
    %1038 = vmatpush1.msra.mxu0 %v531
    %1039 = vmatprep.subr.mxu0 0.0
    %1040 = vmatpush1.msra.mxu0 %v532
    %1041 = vmatprep.subr.mxu0 0.0
    %1042 = vmatpush1.msra.mxu0 %v533
    %1043 = vmatprep.subr.mxu0 0.0
    %1044 = vmatpush1.msra.mxu0 %v534
    %1045 = vmatprep.subr.mxu0 0.0
    %1046 = vmatpush1.msra.mxu0 %v535
    %1047 = vmatprep.subr.mxu0 0.0
    %1048 = vmatpush1.msra.mxu0 %v536
    %1049 = vmatprep.subr.mxu0 0.0
    %1050 = vmatpush1.msra.mxu0 0.0
    %1051 = vmatprep.subr.mxu0 0.0
    %1052 = vmatpush1.msra.mxu0 0.0
    %1053 = vmatprep.subr.mxu0 0.0
    %1054 = vmatpush1.msra.mxu0 0.0
    %1055 = vmatprep.subr.mxu0 0.0
    %1056 = vmatpush1.msra.mxu0 0.0
    %1057 = vmatprep.subr.mxu0 0.0
    %1058 = vmatpush1.msra.mxu0 0.0
    %1059 = vmatprep.subr.mxu0 0.0
    %1060 = vmatpush1.msra.mxu0 0.0
    %1061 = vmatprep.subr.mxu0 0.0
    %1062 = vmatpush1.msra.mxu0 0.0
    %1063 = vmatprep.subr.mxu0 0.0
    %1064 = vmatpush1.msra.mxu0 0.0
    %1065 = vmatprep.subr.mxu0 0.0
    %1066 = vmatpush1.msra.mxu0 0.0
    %1067 = vmatprep.subr.mxu0 0.0
    %1068 = vmatpush1.msra.mxu0 0.0
    %1069 = vmatprep.subr.mxu0 0.0
    %1070 = vmatpush1.msra.mxu0 0.0
    %1071 = vmatprep.subr.mxu0 0.0
    %1072 = vmatpush1.msra.mxu0 0.0
    %1073 = vmatprep.subr.mxu0 0.0
    %1074 = vmatpush1.msra.mxu0 0.0
    %1075 = vmatprep.subr.mxu0 0.0
    %1076 = vmatpush1.msra.mxu0 0.0
    %1077 = vmatprep.subr.mxu0 0.0
    %1078 = vmatpush1.msra.mxu0 0.0
    %1079 = vmatprep.subr.mxu0 0.0
    %1080 = vmatpush1.msra.mxu0 0.0
    %1081 = vmatprep.mubr.f32.mxu0 0.0
    %1082 = vmatmul.mubr.f32.gmra.mrb[0].mxu0 %v583
    %v1083 = vpop.f32.mrb[0].mxu0
    %v1084 = vadd.f32 %v1014, %v1083
    %v1085 = vpop.f32.mrb[0].mxu0
    %1086 = vdwg.mxu0
    %v1087 = vsub.f32 0.0, %v1084
    %v1088 = vmul.f32 %v1087, 1.442695
    %v1089 = vpow.pop %v1088
    %v1090 = vadd.f32 %v1089, 1.0
    %v1091 = vrcp.pop %v1090
    %v1092 = vmul.f32 1.0, %v1091
    %1093 = vst [vmem:[#allocation7] sm:$0x3] %v1092
    // Predicated region
    $region22: #{tpu_custom_call.1} parent=1 // pred_check
      _
    $region23: #{tpu_custom_call.1} parent=1 // pred_check_branch
      %1095 = sbr.rel (0) target = $region25
    $region24: #{tpu_custom_call.1} parent=1 // pred_region
      %s1097 = ssub.s32 32, 32
      %1098 = vsyncadd [#allocation4], %s1097
      %s1100 = sshll.u32 [#allocation7], 4
      %s1101 = int_to_ptr.vmem [resolvable:$true] %s1100
      %1103 = dma.vmem_to_hbm [thread:$0]  %s1101, 32, %s3, [#allocation4]
    $region25: #{tpu_custom_call.1} parent=1 // pred_fallthru
      _
    // Predicated region
    $region26: #{tpu_custom_call.1} parent=1 // pred_check
      _
    $region27: #{tpu_custom_call.1} parent=1 // pred_check_branch
      %1105 = sbr.rel (0) target = $region29
    $region28: #{tpu_custom_call.1} parent=1 // pred_region
      %1106 = dma.done [#allocation4], 32
    $region29: #{tpu_custom_call.1} parent=1 // pred_fallthru
      _
    %1107 = vsyncpa [#allocation3], 1
    %1108 = vsyncpa [#allocation6], 1
    %1109 = vsyncpa [#allocation4], 1

</llo_original>
